<compile_context>
chip_gen: v7x
topology: tpu7x:2x2x1
jax: 0.10.0
libtpu: 0.0.40
codegen_flags: <defaults>
</compile_context>

<pallas_src>
import functools
import math

import jax
import jax.numpy as jnp
from jax import lax
from jax.experimental import pallas as pl
from jax.experimental.pallas import tpu as pltpu


def _label_smoothing_kernel(x_ref, t_ref, o_ref, *, padding_idx, confidence,
                            smooth_val, tile_n, tile_v, unroll):
    j = pl.program_id(1)                                   # vocab-block index

    # Zero the resident per-row-block accumulator on the first vocab step.
    @pl.when(j == 0)
    def _():
        o_ref[...] = jnp.zeros_like(o_ref)

    # Global column index and per-column smoothing weight, shared by every
    # 8-row chunk of this block (padding-column mask costs nothing per chunk).
    col = j * tile_v + lax.broadcasted_iota(jnp.int32, (8, tile_v), 1)
    base_w = jnp.where(col == padding_idx, 0.0, smooth_val).astype(jnp.float32)

    n_lane_groups = tile_v // 128
    n_chunks = tile_n // 8

    def body(r, acc):
        rows = pl.ds(pl.multiple_of(r * 8, 8), 8)
        x_chunk = x_ref[rows, :].astype(jnp.float32)       # (8, tile_v)
        t_chunk = t_ref[rows, :]                           # (8, 1) int32
        # true_dist weight: confidence at the target column, smooth_val
        # elsewhere, 0 at the padding column and on rows whose target is
        # padding_idx (matches scatter_ + [:, pad]=0 + index_fill_).
        w = jnp.where(col == t_chunk, confidence, base_w)
        w = jnp.where(t_chunk != padding_idx, w, 0.0)
        contrib = w * x_chunk                              # true_dist * x
        # (8, tile_v) -> (8, 128) with tile-aligned vreg adds only (no XLU).
        part = contrib[:, 0:128]
        for k in range(1, n_lane_groups):
            part = part + contrib[:, k * 128:(k + 1) * 128]
        return acc + part

    acc = lax.fori_loop(0, n_chunks, body, jnp.zeros((8, 128), jnp.float32),
                        unroll=unroll)
    o_ref[...] += acc[None, :, :]


def label_smoothing_loss(x, target, *, padding_idx, smoothing,
                         tile_n=512, tile_v=1024):
    """Pallas equivalent of LabelSmoothing.forward (summed KL-div loss)."""
    N, V = x.shape
    assert V > 2, "label smoothing requires size > 2 (smoothing / (size - 2))"
    confidence = 1.0 - smoothing
    smooth_val = smoothing / (V - 2)
    conf_logconf = confidence * math.log(confidence) if confidence > 0.0 else 0.0
    smooth_logsmooth = (smooth_val * math.log(smooth_val)
                        if smooth_val > 0.0 else 0.0)

    # Keep bf16 inputs in bf16 (halves HBM traffic); upcast happens in-kernel.
    if x.dtype not in (jnp.bfloat16, jnp.float32):
        x = x.astype(jnp.float32)

    def rup(a, b):
        return (a + b - 1) // b * b

    # Rows per block: multiple of 8; keep >= 2 row blocks whenever N >= 16 so
    # the "parallel" row axis can be split across both v7x TensorCores.
    half_rows = max(8, rup(pl.cdiv(N, 2), 8))
    tn = max(8, min(rup(tile_n, 8), half_rows))
    tv = rup(min(tile_v, rup(V, 128)), 128)
    Np, Vp = rup(N, tn), rup(V, tv)

    # Pad only when shapes are ragged (aligned shapes take the zero-copy path).
    if Np != N or Vp != V:
        x = jnp.pad(x, ((0, Np - N), (0, Vp - V)))
    tgt = target.astype(jnp.int32)
    if Np != N:
        tgt = jnp.pad(tgt, (0, Np - N), constant_values=padding_idx)
    tgt = tgt.reshape(Np, 1)

    grid = (Np // tn, Vp // tv)
    n_chunks = tn // 8
    unroll = 4 if n_chunks % 4 == 0 else (2 if n_chunks % 2 == 0 else 1)

    # TODO(synk): optional v7x bf16 path -- offload the smooth-bulk row-sum to
    # the idle MXU (x_tile @ ones mask); the VPU path below keeps f32 exactness.

    kernel = functools.partial(
        _label_smoothing_kernel,
        padding_idx=padding_idx, confidence=confidence, smooth_val=smooth_val,
        tile_n=tn, tile_v=tv, unroll=unroll)

    cost = pl.CostEstimate(
        flops=5 * Np * Vp,
        transcendentals=0,
        bytes_accessed=Np * Vp * x.dtype.itemsize + Np * 4
                       + grid[0] * 8 * 128 * 4)

    partials = pl.pallas_call(
        kernel,
        out_shape=jax.ShapeDtypeStruct((grid[0], 8, 128), jnp.float32),
        grid_spec=pltpu.PrefetchScalarGridSpec(
            num_scalar_prefetch=0,
            grid=grid,
            in_specs=[
                pl.BlockSpec((tn, tv), lambda i, j: (i, j)),   # x tile
                pl.BlockSpec((tn, 1), lambda i, j: (i, 0)),    # labels per row block
            ],
            out_specs=pl.BlockSpec((1, 8, 128), lambda i, j: (i, 0, 0)),
        ),
        compiler_params=pltpu.CompilerParams(
            dimension_semantics=("parallel", "arbitrary")),
        cost_estimate=cost,
    )(x, tgt)

    # KL(true_dist || softmax) summed = sum(td*log td) - sum(td * x).
    # The first term is a closed-form constant per valid (non-padding) row.
    n_valid = jnp.sum((target != padding_idx).astype(jnp.float32))
    const = n_valid * jnp.float32(conf_logconf + (V - 2) * smooth_logsmooth)
    return const - jnp.sum(partials)


def _reference_loss(x, target, padding_idx, smoothing):
    N, V = x.shape
    confidence = 1.0 - smoothing
    smooth_val = smoothing / (V - 2)
    col = jnp.arange(V)[None, :]
    t = target[:, None]
    td = jnp.where(col == t, confidence, smooth_val).astype(jnp.float32)
    td = jnp.where(col == padding_idx, 0.0, td)
    td = jnp.where(t == padding_idx, 0.0, td)
    kl = jnp.where(td > 0.0, td * (jnp.log(td) - x.astype(jnp.float32)), 0.0)
    return jnp.sum(kl)


if __name__ == "__main__":
    key = jax.random.PRNGKey(0)
    padding_idx = 0
    smoothing = 0.1

    # --- Test 1: classic tiny LabelSmoothing demo shape (2 row blocks). ---
    N, V = 16, 11
    k1, k2 = jax.random.split(key)
    logits = jax.random.normal(k1, (N, V), dtype=jnp.float32)
    x = jax.nn.log_softmax(logits, axis=-1)
    target = jax.random.randint(k2, (N,), 0, V, dtype=jnp.int32)
    target = target.at[3].set(padding_idx).at[7].set(padding_idx)

    loss = label_smoothing_loss(x, target, padding_idx=padding_idx,
                                smoothing=smoothing)
    loss = jax.block_until_ready(loss)
    ref = _reference_loss(x, target, padding_idx, smoothing)
    assert jnp.allclose(loss, ref, rtol=1e-5, atol=1e-4), (loss, ref)

    # --- Test 2: ragged shapes, multi-block grid in both axes + padding. ---
    N2, V2 = 40, 700
    k3, k4 = jax.random.split(k2)
    logits2 = jax.random.normal(k3, (N2, V2), dtype=jnp.float32)
    x2 = jax.nn.log_softmax(logits2, axis=-1)
    target2 = jax.random.randint(k4, (N2,), 0, V2, dtype=jnp.int32)
    target2 = target2.at[5].set(padding_idx).at[21].set(padding_idx)

    loss2 = label_smoothing_loss(x2, target2, padding_idx=padding_idx,
                                 smoothing=smoothing, tile_n=16, tile_v=256)
    loss2 = jax.block_until_ready(loss2)
    ref2 = _reference_loss(x2, target2, padding_idx, smoothing)
    assert jnp.allclose(loss2, ref2, rtol=2e-4, atol=1e-2), (loss2, ref2)

    # --- Test 3: bf16 inputs, default tiles (bf16 kept in HBM, f32 in-kernel). ---
    N3, V3 = 64, 1500
    k5, k6 = jax.random.split(k4)
    logits3 = jax.random.normal(k5, (N3, V3), dtype=jnp.float32)
    x3 = jax.nn.log_softmax(logits3, axis=-1).astype(jnp.bfloat16)
    target3 = jax.random.randint(k6, (N3,), 0, V3, dtype=jnp.int32)
    target3 = target3.at[2].set(padding_idx).at[17].set(padding_idx)

    loss3 = label_smoothing_loss(x3, target3, padding_idx=padding_idx,
                                 smoothing=smoothing)
    loss3 = jax.block_until_ready(loss3)
    ref3 = _reference_loss(x3, target3, padding_idx, smoothing)
    assert jnp.allclose(loss3, ref3, rtol=2e-4, atol=1e-2), (loss3, ref3)

    print("KERNEL_OK")
</pallas_src>

<mosaic_0001>
module attributes {stable_mosaic.version = 11 : i64} {
  func.func @_label_smoothing_kernel(%arg0: i32, %arg1: i32, %arg2: memref<8x128xf32, #tpu.memory_space<vmem>>, %arg3: memref<8x1xi32, #tpu.memory_space<vmem>>, %arg4: memref<1x8x128xf32, #tpu.memory_space<vmem>>) attributes {dimension_semantics = [#tpu.dimension_semantics<parallel>, #tpu.dimension_semantics<arbitrary>], iteration_bounds = array<i64: 2, 1>, scalar_prefetch = 0 : i64, scratch_operands = 0 : i64, tpu.core_type = #tpu.core_type<tc>, window_params = [{transform_indices = @transform_0, window_bounds = array<i64: 8, 128>}, {transform_indices = @transform_1, window_bounds = array<i64: 8, 1>}, {transform_indices = @transform_2, window_bounds = array<i64: 1, 8, 128>}]} {
    %c0_i32 = arith.constant 0 : i32
    %0 = arith.cmpi eq, %arg1, %c0_i32 : i32
    %1 = arith.extui %0 : i1 to i32
    %c0_i32_0 = arith.constant 0 : i32
    %2 = arith.cmpi ne, %1, %c0_i32_0 : i32
    scf.if %2 {
      %cst_15 = arith.constant 0.000000e+00 : f32
      %35 = vector.broadcast %cst_15 : f32 to vector<1x8x128xf32>
      %c0_16 = arith.constant 0 : index
      %c0_17 = arith.constant 0 : index
      %c0_18 = arith.constant 0 : index
      %36 = vector.load %arg4[%c0_16, %c0_17, %c0_18] : memref<1x8x128xf32, #tpu.memory_space<vmem>>, vector<1x8x128xf32>
      tpu.vector_store %arg4[%c0_16, %c0_17, %c0_18], %35 {strides = array<i32>} : memref<1x8x128xf32, #tpu.memory_space<vmem>>, vector<1x8x128xf32>,
    } else {
    }
    %c128_i32 = arith.constant 128 : i32
    %3 = arith.muli %arg1, %c128_i32 : i32
    %4 = tpu.iota {dimensions = array<i32: 1>} : vector<8x128xi32>
    %5 = vector.broadcast %3 : i32 to vector<8x128xi32>
    %6 = arith.addi %5, %4 : vector<8x128xi32>
    %c0_i32_1 = arith.constant 0 : i32
    %7 = vector.broadcast %c0_i32_1 : i32 to vector<8x128xi32>
    %8 = arith.cmpi eq, %6, %7 : vector<8x128xi32>
    %cst = arith.constant 0.000000e+00 : f32
    %cst_2 = arith.constant 0.0111111114 : f32
    %9 = vector.broadcast %cst : f32 to vector<8x128xf32>
    %10 = vector.broadcast %cst_2 : f32 to vector<8x128xf32>
    %11 = arith.select %8, %9, %10 : vector<8x128xi1>, vector<8x128xf32>
    %cst_3 = arith.constant 0.000000e+00 : f32
    %12 = vector.broadcast %cst_3 : f32 to vector<8x128xf32>
    %c0_i32_4 = arith.constant 0 : i32
    %c8_i32 = arith.constant 8 : i32
    %13 = arith.muli %c0_i32_4, %c8_i32 : i32
    %14 = tpu.assume_multiple %13, 8 : i32
    %15 = arith.index_cast %14 : i32 to index
    %c0 = arith.constant 0 : index
    %16 = vector.load %arg2[%15, %c0] : memref<8x128xf32, #tpu.memory_space<vmem>>, vector<8x128xf32>
    %17 = arith.index_cast %14 : i32 to index
    %c0_5 = arith.constant 0 : index
    %18 = vector.load %arg3[%17, %c0_5] : memref<8x1xi32, #tpu.memory_space<vmem>>, vector<8x1xi32>
    %19 = vector.broadcast %18 : vector<8x1xi32> to vector<8x128xi32>
    %20 = arith.cmpi eq, %6, %19 : vector<8x128xi32>
    %cst_6 = arith.constant 0.899999976 : f32
    %21 = vector.broadcast %cst_6 : f32 to vector<8x128xf32>
    %22 = arith.select %20, %21, %11 : vector<8x128xi1>, vector<8x128xf32>
    %c0_i32_7 = arith.constant 0 : i32
    %23 = vector.broadcast %c0_i32_7 : i32 to vector<8x1xi32>
    %24 = arith.cmpi ne, %18, %23 : vector<8x1xi32>
    %cst_8 = arith.constant 0.000000e+00 : f32
    %25 = vector.shape_cast %24 : vector<8x1xi1> to vector<8x1xi1>
    %26 = vector.broadcast %25 : vector<8x1xi1> to vector<8x128xi1>
    %27 = vector.broadcast %cst_8 : f32 to vector<8x128xf32>
    %28 = arith.select %26, %22, %27 : vector<8x128xi1>, vector<8x128xf32>
    %29 = arith.mulf %28, %16 : vector<8x128xf32>
    %30 = arith.addf %12, %29 : vector<8x128xf32>
    %c1_i32 = arith.constant 1 : i32
    %c0_9 = arith.constant 0 : index
    %c0_10 = arith.constant 0 : index
    %c0_11 = arith.constant 0 : index
    %31 = vector.load %arg4[%c0_9, %c0_10, %c0_11] : memref<1x8x128xf32, #tpu.memory_space<vmem>>, vector<1x8x128xf32>
    %32 = vector.shape_cast %30 : vector<8x128xf32> to vector<1x8x128xf32>
    %33 = arith.addf %31, %32 : vector<1x8x128xf32>
    %c0_12 = arith.constant 0 : index
    %c0_13 = arith.constant 0 : index
    %c0_14 = arith.constant 0 : index
    %34 = vector.load %arg4[%c0_12, %c0_13, %c0_14] : memref<1x8x128xf32, #tpu.memory_space<vmem>>, vector<1x8x128xf32>
    tpu.vector_store %arg4[%c0_12, %c0_13, %c0_14], %33 {strides = array<i32>} : memref<1x8x128xf32, #tpu.memory_space<vmem>>, vector<1x8x128xf32>,
    return
  }
  func.func @transform_0(%arg0: i32, %arg1: i32) -> (i32, i32) {
    %c0_i32 = arith.constant 0 : i32
    return %arg0, %arg1 : i32, i32
  }
  func.func @transform_1(%arg0: i32, %arg1: i32) -> (i32, i32) {
    %c0_i32 = arith.constant 0 : i32
    %c0_i32_0 = arith.constant 0 : i32
    return %arg0, %c0_i32 : i32, i32
  }
  func.func @transform_2(%arg0: i32, %arg1: i32) -> (i32, i32, i32) {
    %c0_i32 = arith.constant 0 : i32
    %c0_i32_0 = arith.constant 0 : i32
    %c0_i32_1 = arith.constant 0 : i32
    return %arg0, %c0_i32, %c0_i32_0 : i32, i32, i32
  }
}

</mosaic_0001>

<llo_original>
// kernel: tpu_custom_call.1
$region0: #{tpu_custom_call.1}
  #allocation0 [shape = 'u32[]', space=smem, size = 0x4, offset = 0x4, fixed_abs, tag = 'smem constant byte address 0x4 - core index']
  #allocation1 [shape = 'u32[144,128]{1,0:T(1,128)}', space=vmem, size = 0x12000, scoped, tag = 'internal scratch']
  %s0 = inlined_call_operand.vmem [shape: f32[16,128], index: 0, kind: input, shape index: {}]
  %s1 = inlined_call_operand.vmem [shape: s32[16,1], index: 1, kind: input, shape index: {}]
  %s2 = inlined_call_operand.hbm [shape: f32[2,8,128], index: 2, kind: output, shape index: {}]
  %s3 = sld [smem:[#allocation0]]
  $region45: #{tpu_custom_call.1} parent=0
    _
  %s5 = ssub.s32 1, %s3
  %s6 = scalar_select 0, %s5, %s3
  $region1: #{tpu_custom_call.1} parent=0
    #allocation2 [shape = 'u8[8192]{0}', space=vmem, size = 0x2000, scoped, tag = 'output window, operand 0']
    #allocation3 [shape = 's32[2]{0}', space=sflag, size = 0x8, scoped, tag = 'scoped memory for tpu_custom_call.1']
    %7 = vsyncpa [#allocation3], 0
    %s8 = scalar_lea.sflag [#allocation3], 1
    %9 = vsyncpa %s8, 0
    loop: start=0, step=1, limit=4
    $region2: #{tpu_custom_call.1} parent=1 // loop_pre_header
      _
    $region3: #{tpu_custom_call.1} parent=1 // loop_header
      %s11 = sphi 0, %s15
      %p12 = scmp.ge.s32.totalorder %s11, 4
      %s18 = sphi 0, %s30
      %s19 = sphi 0, %s26
      %s20 = sphi 0, %s18
      %s21 = sphi 0, %s19
      %s22 = sphi 0, %s20
      %s23 = sphi 0, %s21
      %s35 = sphi 0, %s37
      %s38 = sphi 0, %s35
      %s39 = sphi 0, %s38
      %s55 = sphi 0, %s39
      %s61 = sphi 0, %s63
      %s64 = sphi 0, %s61
      %s65 = sphi 0, %s64
      %s81 = sphi 0, %s65
      %s87 = sphi 0, %s89
      %s90 = sphi 0, %s87
      %s91 = sphi 0, %s90
      %s107 = sphi 0, %s91
    $region4: #{tpu_custom_call.1} parent=1 // loop_header_branch
      %14 = sbr.rel (%p12) target = $region8
    $region5: #{tpu_custom_call.1} parent=1 // loop_body
      %s16 = ssub.s32 %s11, 1
      %s17 = ssub.s32 %s11, 2
      %s24 = sadd.s32 1, %s19
      %p25 = scmp.ge.s32.totalorder %s24, 1
      %s26 = scalar_select %p25, 0, %s24
      %s27 = sadd.s32 1, %s18
      %s28 = scalar_select %p25, %s27, %s18
      %p29 = scmp.ge.s32.totalorder %s28, 2
      %s30 = scalar_select %p29, 0, %s28
      %s31 = ssub.s32 %s18, %s30
      %s32 = ssub.s32 %s19, %s26
      %s33 = sor.u32 %s31, %s32
      %p34 = scmp.eq.s32.totalorder %s33, 0
      %s36 = sadd.s32 %s35, 1
      %s37 = scalar_select %p34, %s35, %s36
      %p40 = pneg %p34
      %p41 = scmp.eq.s32.totalorder %s11, 1
      %p42 = por %p40, %p41
      %p43 = scmp.ne.s32.totalorder %s35, %s38
      %p44 = scmp.eq.s32.totalorder %s11, 0
      %p45 = por %p43, %p44
      %p46 = scmp.ne.s32.totalorder %s35, %s38
      %p47 = scmp.eq.s32.totalorder %s16, 1
      %p48 = por %p46, %p47
      %p49 = scmp.ne.s32.totalorder %s38, %s39
      %p50 = scmp.eq.s32.totalorder %s16, 0
      %p51 = por %p49, %p50
      %p52 = scmp.ne.s32.totalorder %s38, %s39
      %p53 = scmp.eq.s32.totalorder %s17, 1
      %p54 = por %p52, %p53
      %p56 = scmp.ne.s32.totalorder %s39, %s55
      %p57 = scmp.eq.s32.totalorder %s17, 0
      %p58 = por %p56, %p57
      %s59 = ssub.s32 %s18, %s30
      %p60 = scmp.eq.s32.totalorder %s59, 0
      %s62 = sadd.s32 %s61, 1
      %s63 = scalar_select %p60, %s61, %s62
      %p66 = pneg %p60
      %p67 = scmp.eq.s32.totalorder %s11, 1
      %p68 = por %p66, %p67
      %p69 = scmp.ne.s32.totalorder %s61, %s64
      %p70 = scmp.eq.s32.totalorder %s11, 0
      %p71 = por %p69, %p70
      %p72 = scmp.ne.s32.totalorder %s61, %s64
      %p73 = scmp.eq.s32.totalorder %s16, 1
      %p74 = por %p72, %p73
      %p75 = scmp.ne.s32.totalorder %s64, %s65
      %p76 = scmp.eq.s32.totalorder %s16, 0
      %p77 = por %p75, %p76
      %p78 = scmp.ne.s32.totalorder %s64, %s65
      %p79 = scmp.eq.s32.totalorder %s17, 1
      %p80 = por %p78, %p79
      %p82 = scmp.ne.s32.totalorder %s65, %s81
      %p83 = scmp.eq.s32.totalorder %s17, 0
      %p84 = por %p82, %p83
      %s85 = ssub.s32 %s18, %s30
      %p86 = scmp.eq.s32.totalorder %s85, 0
      %s88 = sadd.s32 %s87, 1
      %s89 = scalar_select %p86, %s87, %s88
      %p92 = pneg %p86
      %p93 = scmp.eq.s32.totalorder %s11, 1
      %p94 = por %p92, %p93
      %p95 = scmp.ne.s32.totalorder %s87, %s90
      %p96 = scmp.eq.s32.totalorder %s11, 0
      %p97 = por %p95, %p96
      %p98 = scmp.ne.s32.totalorder %s87, %s90
      %p99 = scmp.eq.s32.totalorder %s16, 1
      %p100 = por %p98, %p99
      %p101 = scmp.ne.s32.totalorder %s90, %s91
      %p102 = scmp.eq.s32.totalorder %s16, 0
      %p103 = por %p101, %p102
      %p104 = scmp.ne.s32.totalorder %s90, %s91
      %p105 = scmp.eq.s32.totalorder %s17, 1
      %p106 = por %p104, %p105
      %p108 = scmp.ne.s32.totalorder %s91, %s107
      %p109 = scmp.eq.s32.totalorder %s17, 0
      %p110 = por %p108, %p109
      %p111 = scmp.le.s32.totalorder 1, %s11
      %p112 = scmp.lt.s32.totalorder %s11, 3
      %p113 = pnand %p111, %p112
      %p114 = pneg %p113
      // Predicated region
      $region9: #{tpu_custom_call.1} parent=5 // pred_check
        _
      $region10: #{tpu_custom_call.1} parent=5 // pred_check_branch
        %116 = sbr.rel (%p113) target = $region12
      $region11: #{tpu_custom_call.1} parent=5 // pred_region
        %s117 = ssub.s32 %s11, 1
      $region12: #{tpu_custom_call.1} parent=5 // pred_fallthru
        _
      %p118 = scmp.lt.s32.totalorder %s11, 2
      // Predicated region
      $region13: #{tpu_custom_call.1} parent=5 // pred_check
        %p119 = pneg %p118
      $region14: #{tpu_custom_call.1} parent=5 // pred_check_branch
        %121 = sbr.rel (%p119) target = $region16
      $region15: #{tpu_custom_call.1} parent=5 // pred_region
        // Predicated region
        $region17: #{tpu_custom_call.1} parent=15 // pred_check
          %p122 = pneg %p45
        $region18: #{tpu_custom_call.1} parent=15 // pred_check_branch
          %124 = sbr.rel (%p122) target = $region20
        $region19: #{tpu_custom_call.1} parent=15 // pred_region
          %p125 = scmp.lt.s32.totalorder %s18, 1
          %s126 = scalar_select %p125, %s18, 1
          %p127 = scmp.lt.s32.totalorder %s19, 0
          %s128 = scalar_select %p127, %s19, 0
          %s129 = sadd.s32 %s128, %s126
          %s130 = smul.addr %s129, 8
          %s131 = scalar_lea.vmem %s0, %s130
        $region20: #{tpu_custom_call.1} parent=15 // pred_fallthru
          _
        // Predicated region
        $region21: #{tpu_custom_call.1} parent=15 // pred_check
          %p132 = pneg %p71
        $region22: #{tpu_custom_call.1} parent=15 // pred_check_branch
          %134 = sbr.rel (%p132) target = $region24
        $region23: #{tpu_custom_call.1} parent=15 // pred_region
          %p135 = scmp.lt.s32.totalorder %s18, 1
          %s136 = scalar_select %p135, %s18, 1
          %s137 = smul.addr %s136, 8
          %s138 = scalar_lea.vmem %s1, %s137
        $region24: #{tpu_custom_call.1} parent=15 // pred_fallthru
          _
      $region16: #{tpu_custom_call.1} parent=5 // pred_fallthru
        _
      %p139 = scmp.le.s32.totalorder 1, %s11
      %p140 = scmp.lt.s32.totalorder %s11, 3
      %p141 = pnand %p139, %p140
      %p142 = pneg %p141
      // Predicated region
      $region25: #{tpu_custom_call.1} parent=5 // pred_check
        _
      $region26: #{tpu_custom_call.1} parent=5 // pred_check_branch
        %144 = sbr.rel (%p141) target = $region28
      $region27: #{tpu_custom_call.1} parent=5 // pred_region
        %s145 = ssub.s32 %s11, 1
        %p146 = scmp.lt.s32.totalorder %s20, 1
        %s147 = scalar_select %p146, %s20, 1
        %p148 = scmp.lt.s32.totalorder %s21, 0
        %s149 = scalar_select %p148, %s21, 0
        %s150 = sadd.s32 %s149, %s147
        %s151 = smul.addr %s150, 8
        %s152 = scalar_lea.vmem %s0, %s151
        %p153 = pneg %p51
        %p154 = pneg %p48
        %p155 = scmp.lt.s32.totalorder %s20, 1
        %s156 = scalar_select %p155, %s20, 1
        %s157 = smul.addr %s156, 8
        %s158 = scalar_lea.vmem %s1, %s157
        %p159 = pneg %p77
        %p160 = pneg %p74
        %p161 = pneg %p103
        %p162 = pneg %p100
        %s163 = sand.u32 %s90, 1
        %s164 = scalar_lea.sflag [#allocation3], %s163
        %s165 = sand.u32 %s90, 1
        %s166 = smul.addr %s165, 8
        %s167 = scalar_lea.vmem [#allocation2], %s166
        %p168 = scmp.lt.s32.totalorder %s20, 1
        %s169 = scalar_select %p168, %s20, 1
        %p170 = scmp.lt.s32.totalorder %s21, 0
        %s171 = scalar_select %p170, %s21, 0
        %s172 = sadd.s32 %s171, %s169
        %s173 = smul.addr %s172, 8
        %s174 = scalar_lea.vmem %s0, %s173
        %p175 = scmp.lt.s32.totalorder %s20, 1
        %s176 = scalar_select %p175, %s20, 1
        %s177 = smul.addr %s176, 8
        %s178 = scalar_lea.vmem %s1, %s177
        %p179 = scmp.eq.s32.totalorder %s21, 0
        // Predicated region
        $region29: #{tpu_custom_call.1} parent=27 // pred_check
          %p180 = pneg %p179
        $region30: #{tpu_custom_call.1} parent=27 // pred_check_branch
          %182 = sbr.rel (%p180) target = $region32
        $region31: #{tpu_custom_call.1} parent=27 // pred_region
          %183 = vst [vmem:[%s167] sm:$0xff] 0.0
        $region32: #{tpu_custom_call.1} parent=27 // pred_fallthru
          _
        %s184 = smul.u32 %s21, 128
        %v185 = vlaneseq
        %v186 = vand.u32 %v185, 127
        %v187 = vstv %s184
        %v188 = vadd.s32 %v187, %v186
        %vm189 = vcmp.eq.s32.totalorder %v188, 0
        %v190 = vsel %vm189, 0.0, 0.011111111
        %v191 = vld [vmem:[%s174] sm:$0xff]
        %v192 = vld [vmem:[%s178] sm:$0xff]
        %193 = vset.pattern.permute.xlu0 0
        %194 = vperm.xlu0 %193, %v192
        %v195 = vpop.permute.xlu0 %194
        %vm196 = vcmp.eq.s32.totalorder %v188, %v195
        %v197 = vsel %vm196, 0.9, %v190
        %vm198 = vcmp.ne.s32.totalorder %v192, 0
        %v199 = vsel %vm198, 1, 0
        %200 = vset.pattern.permute.xlu0 0
        %201 = vperm.xlu0 %200, %v199
        %v202 = vpop.permute.xlu0 %201
        %vm203 = vcmp.eq.s32.totalorder %v202, 1
        %v204 = vsel %vm203, %v197, 0.0
        %v205 = vmul.f32 %v204, %v191
        %v206 = vadd.f32 %v205, 0.0
        %v207 = vld [vmem:[%s167] sm:$0xff]
        %v208 = vadd.f32 %v207, %v206
        %209 = vst [vmem:[%s167] sm:$0xff] %v208
        %s210 = sand.u32 %s90, 1
        %s211 = scalar_lea.sflag [#allocation3], %s210
        %s212 = sand.u32 %s90, 1
        %s213 = smul.addr %s212, 8
        %s214 = scalar_lea.vmem [#allocation2], %s213
        // Predicated region
        $region33: #{tpu_custom_call.1} parent=27 // pred_check
          %p215 = pneg %p100
        $region34: #{tpu_custom_call.1} parent=27 // pred_check_branch
          %217 = sbr.rel (%p215) target = $region36
        $region35: #{tpu_custom_call.1} parent=27 // pred_region
          %s219 = ssub.s32 128, 128
          %220 = vsyncadd %s211, %s219
          %s221 = smul.addr %s20, 128
          %s222 = scalar_lea.hbm %s2, %s221
          %s224 = sshll.u32 %s214, 4
          %s225 = int_to_ptr.vmem [resolvable:$true] %s224
          %227 = dma.vmem_to_hbm [thread:$0]  %s225, 128, %s222, %s211
        $region36: #{tpu_custom_call.1} parent=27 // pred_fallthru
          _
      $region28: #{tpu_custom_call.1} parent=5 // pred_fallthru
        _
      %p228 = scmp.le.s32.totalorder 2, %s11
      // Predicated region
      $region37: #{tpu_custom_call.1} parent=5 // pred_check
        %p229 = pneg %p228
      $region38: #{tpu_custom_call.1} parent=5 // pred_check_branch
        %231 = sbr.rel (%p229) target = $region40
      $region39: #{tpu_custom_call.1} parent=5 // pred_region
        %s232 = ssub.s32 %s11, 2
        // Predicated region
        $region41: #{tpu_custom_call.1} parent=39 // pred_check
          %p233 = pneg %p106
        $region42: #{tpu_custom_call.1} parent=39 // pred_check_branch
          %235 = sbr.rel (%p233) target = $region44
        $region43: #{tpu_custom_call.1} parent=39 // pred_region
          %s236 = sand.u32 %s91, 1
          %s237 = scalar_lea.sflag [#allocation3], %s236
          %s238 = sand.u32 %s91, 1
          %s239 = smul.addr %s238, 8
          %s240 = scalar_lea.vmem [#allocation2], %s239
          %241 = dma.done %s237, 128
        $region44: #{tpu_custom_call.1} parent=39 // pred_fallthru
          _
      $region40: #{tpu_custom_call.1} parent=5 // pred_fallthru
        _
    $region6: #{tpu_custom_call.1} parent=1 // loop_footer
      %s15 = sadd.s32 1, %s11
    $region7: #{tpu_custom_call.1} parent=1 // loop_footer_branch
      %10 = sbr.rel target = $region3
    $region8: #{tpu_custom_call.1} parent=1 // loop_exit
      _
    %242 = vsyncpa [#allocation3], 1
    %s243 = scalar_lea.sflag [#allocation3], 1
    %244 = vsyncpa %s243, 1

</llo_original>
